<compile_context>
chip_gen: v7x
topology: tpu7x:2x2x1
jax: 0.10.0
libtpu: 0.0.40
codegen_flags: <defaults>
</compile_context>

<pallas_src>
import functools

import jax
import jax.numpy as jnp
from jax.experimental import pallas as pl
from jax.experimental.pallas import tpu as pltpu


# ----------------------------------------------------------------------------
# Model configuration (small, consistent with HamiltonianNNModel(D_in, N, L))
# ----------------------------------------------------------------------------
D_IN = 4          # must be even for the symplectic J
N_NODES = 32
N_LAYERS = 2
BATCH = 16


def build_J(d_in: int) -> jnp.ndarray:
    """Canonical symplectic matrix J = [[0, I], [-I, 0]]."""
    d = d_in // 2
    eye = jnp.eye(d, dtype=jnp.float32)
    zeros = jnp.zeros((d, d), dtype=jnp.float32)
    return jnp.concatenate(
        [jnp.concatenate([zeros, eye], axis=1),
         jnp.concatenate([-eye, zeros], axis=1)], axis=0)


def init_params(key, d_in: int, n_nodes: int, n_layers: int):
    """Deterministic init mimicking nn.Linear defaults (U(-1/sqrt(fan_in), ...))."""
    chs = [d_in] + n_layers * [n_nodes]
    params = []
    for i in range(n_layers):
        fan_in = chs[i]
        key, kw, kb = jax.random.split(key, 3)
        bound = 1.0 / jnp.sqrt(fan_in)
        w = jax.random.uniform(kw, (chs[i + 1], chs[i]), jnp.float32, -bound, bound)
        b = jax.random.uniform(kb, (1, chs[i + 1]), jnp.float32, -bound, bound)
        params.append((w, b))
    # Final Linear(N_nodes -> 1). Its bias does not affect dH/dx; only the weight does.
    key, kw = jax.random.split(key)
    bound = 1.0 / jnp.sqrt(n_nodes)
    w_out = jax.random.uniform(kw, (1, n_nodes), jnp.float32, -bound, bound)
    return params, w_out


def prepare_kernel_params(params, w_out, J):
    """One-time preprocessing into kernel-ready operands.

    Returns:
      fwd_wts[i] : (in, out)  pre-transposed weight for the forward dot
      biases[i]  : (1, out)
      bwd_wts[i] : (out, in)  weight for the backward dot; for layer 0 the
                   symplectic J is folded in as W_1 @ J.T (exact: J is a
                   signed permutation, so entries are +/- entries of W_1).
      w_out      : (1, N)     final-layer weight (gradient seed)
    """
    fwd_wts = [w.T for (w, _) in params]
    biases = [b for (_, b) in params]
    bwd_wts = [w for (w, _) in params]
    bwd_wts[0] = params[0][0] @ J.T
    return fwd_wts, biases, bwd_wts, w_out


# ----------------------------------------------------------------------------
# Pallas kernel
# ----------------------------------------------------------------------------
def _hnn_kernel(n_layers, *refs):
    # refs layout: x, (Wt_1, b_1, Wb_1), ..., (Wt_L, b_L, Wb_L), w_out, out
    x_ref = refs[0]
    layer_refs = [(refs[1 + 3 * i], refs[2 + 3 * i], refs[3 + 3 * i])
                  for i in range(n_layers)]
    wo_ref = refs[1 + 3 * n_layers]
    out_ref = refs[2 + 3 * n_layers]

    # ---- forward pass through tanh layers (keep activations for backprop) ----
    h = x_ref[...]
    hs = []
    for (wt_ref, b_ref, _) in layer_refs:
        z = jnp.dot(h, wt_ref[...], preferred_element_type=jnp.float32) + b_ref[...]
        h = jnp.tanh(z)
        hs.append(h)

    # ---- analytic reverse-mode grad of H = h_L @ w_out.T (+ b_out) wrt x ----
    # dH/dz_L = w_out * (1 - h_L^2)   (w_out row broadcasts over the batch)
    g = wo_ref[...] * (1.0 - hs[-1] * hs[-1])
    for li in range(n_layers - 1, 0, -1):
        # through Linear_{li+1}: dH/dh_{li} = g @ W_{li+1}
        g = jnp.dot(g, layer_refs[li][2][...], preferred_element_type=jnp.float32)
        # through tanh_{li}: dH/dz_{li}
        g = g * (1.0 - hs[li - 1] * hs[li - 1])
    # Last backward matrix is W_1 @ J.T, so this directly yields f = dHdx @ J.T.
    f = jnp.dot(g, layer_refs[0][2][...], preferred_element_type=jnp.float32)
    out_ref[...] = f.astype(out_ref.dtype)


def hamiltonian_nn_forward(t, x, fwd_wts, biases, bwd_wts, w_out):
    """Pallas-backed equivalent of HamiltonianNNModel.forward(t, x)."""
    del t  # unused, as in the PyTorch module
    B, d_in = x.shape
    n_layers = len(fwd_wts)

    kernel = functools.partial(_hnn_kernel, n_layers)

    flat_inputs = [x]
    for i in range(n_layers):
        flat_inputs.extend([fwd_wts[i], biases[i], bwd_wts[i]])
    flat_inputs.append(w_out)

    # Grid-free: every operand is a full-array block resident in VMEM.
    vmem_spec = pl.BlockSpec(memory_space=pltpu.MemorySpace.VMEM)

    return pl.pallas_call(
        kernel,
        out_shape=jax.ShapeDtypeStruct((B, d_in), x.dtype),
        in_specs=[vmem_spec] * len(flat_inputs),
        out_specs=vmem_spec,
    )(*flat_inputs)


# ----------------------------------------------------------------------------
# Pure-JAX reference (mirrors the PyTorch functorch.grad path)
# ----------------------------------------------------------------------------
def _reference_forward(x, params, w_out, J):
    def hamiltonian_sum(xi):
        h = xi
        for (w, b) in params:
            h = jnp.tanh(h @ w.T + b)
        H = h @ w_out.T  # (B, 1); output bias is irrelevant for the gradient
        return H[:, 0].sum()

    dHdx = jax.grad(hamiltonian_sum)(x)
    return dHdx @ J.T


if __name__ == "__main__":
    key = jax.random.PRNGKey(0)
    key, kx = jax.random.split(key)

    params, w_out = init_params(key, D_IN, N_NODES, N_LAYERS)
    J = build_J(D_IN)
    fwd_wts, biases, bwd_wts, w_out_k = prepare_kernel_params(params, w_out, J)

    x = jax.random.normal(kx, (BATCH, D_IN), jnp.float32)
    t = jnp.zeros((), jnp.float32)  # unused, matches forward(t, x) signature

    f = hamiltonian_nn_forward(t, x, fwd_wts, biases, bwd_wts, w_out_k)
    f = jax.block_until_ready(f)

    f_ref = _reference_forward(x, params, w_out, J)
    assert f.shape == (BATCH, D_IN)
    assert jnp.allclose(f, f_ref, atol=1e-5, rtol=1e-5), (
        f"max abs err {jnp.max(jnp.abs(f - f_ref))}")

    print("KERNEL_OK")
</pallas_src>

<mosaic_0001>
module attributes {stable_mosaic.version = 11 : i64} {
  func.func @_hnn_kernel(%arg0: memref<16x4xf32, #tpu.memory_space<vmem>>, %arg1: memref<4x32xf32, #tpu.memory_space<vmem>>, %arg2: memref<1x32xf32, #tpu.memory_space<vmem>>, %arg3: memref<32x4xf32, #tpu.memory_space<vmem>>, %arg4: memref<32x32xf32, #tpu.memory_space<vmem>>, %arg5: memref<1x32xf32, #tpu.memory_space<vmem>>, %arg6: memref<32x32xf32, #tpu.memory_space<vmem>>, %arg7: memref<1x32xf32, #tpu.memory_space<vmem>>, %arg8: memref<16x4xf32, #tpu.memory_space<vmem>>) attributes {dimension_semantics = [], scalar_prefetch = 0 : i64, scratch_operands = 0 : i64, tpu.core_type = #tpu.core_type<tc>} {
    %c0 = arith.constant 0 : index
    %c0_0 = arith.constant 0 : index
    %0 = vector.load %arg0[%c0, %c0_0] : memref<16x4xf32, #tpu.memory_space<vmem>>, vector<16x4xf32>
    %c0_1 = arith.constant 0 : index
    %c0_2 = arith.constant 0 : index
    %1 = vector.load %arg1[%c0_1, %c0_2] : memref<4x32xf32, #tpu.memory_space<vmem>>, vector<4x32xf32>
    %cst = arith.constant dense<0.000000e+00> : vector<16x32xf32>
    %2 = tpu.matmul %0, %1, %cst {dimension_numbers = #tpu.dot_dimension_numbers<[1], [0], [0], [1], [0, 0, 1, 1], [], []>} : vector<16x4xf32>, vector<4x32xf32>, vector<16x32xf32> -> vector<16x32xf32>
    %c0_3 = arith.constant 0 : index
    %c0_4 = arith.constant 0 : index
    %3 = vector.load %arg2[%c0_3, %c0_4] : memref<1x32xf32, #tpu.memory_space<vmem>>, vector<1x32xf32>
    %4 = vector.broadcast %3 : vector<1x32xf32> to vector<16x32xf32>
    %5 = arith.addf %2, %4 : vector<16x32xf32>
    %6 = math.tanh %5 : vector<16x32xf32>
    %c0_5 = arith.constant 0 : index
    %c0_6 = arith.constant 0 : index
    %7 = vector.load %arg4[%c0_5, %c0_6] : memref<32x32xf32, #tpu.memory_space<vmem>>, vector<32x32xf32>
    %cst_7 = arith.constant dense<0.000000e+00> : vector<16x32xf32>
    %8 = tpu.matmul %6, %7, %cst_7 {dimension_numbers = #tpu.dot_dimension_numbers<[1], [0], [0], [1], [0, 0, 1, 1], [], []>} : vector<16x32xf32>, vector<32x32xf32>, vector<16x32xf32> -> vector<16x32xf32>
    %c0_8 = arith.constant 0 : index
    %c0_9 = arith.constant 0 : index
    %9 = vector.load %arg5[%c0_8, %c0_9] : memref<1x32xf32, #tpu.memory_space<vmem>>, vector<1x32xf32>
    %10 = vector.broadcast %9 : vector<1x32xf32> to vector<16x32xf32>
    %11 = arith.addf %8, %10 : vector<16x32xf32>
    %12 = math.tanh %11 : vector<16x32xf32>
    %c0_10 = arith.constant 0 : index
    %c0_11 = arith.constant 0 : index
    %13 = vector.load %arg7[%c0_10, %c0_11] : memref<1x32xf32, #tpu.memory_space<vmem>>, vector<1x32xf32>
    %14 = arith.mulf %12, %12 : vector<16x32xf32>
    %cst_12 = arith.constant 1.000000e+00 : f32
    %15 = vector.broadcast %cst_12 : f32 to vector<16x32xf32>
    %16 = arith.subf %15, %14 : vector<16x32xf32>
    %17 = vector.broadcast %13 : vector<1x32xf32> to vector<16x32xf32>
    %18 = arith.mulf %17, %16 : vector<16x32xf32>
    %c0_13 = arith.constant 0 : index
    %c0_14 = arith.constant 0 : index
    %19 = vector.load %arg6[%c0_13, %c0_14] : memref<32x32xf32, #tpu.memory_space<vmem>>, vector<32x32xf32>
    %cst_15 = arith.constant dense<0.000000e+00> : vector<16x32xf32>
    %20 = tpu.matmul %18, %19, %cst_15 {dimension_numbers = #tpu.dot_dimension_numbers<[1], [0], [0], [1], [0, 0, 1, 1], [], []>} : vector<16x32xf32>, vector<32x32xf32>, vector<16x32xf32> -> vector<16x32xf32>
    %21 = arith.mulf %6, %6 : vector<16x32xf32>
    %cst_16 = arith.constant 1.000000e+00 : f32
    %22 = vector.broadcast %cst_16 : f32 to vector<16x32xf32>
    %23 = arith.subf %22, %21 : vector<16x32xf32>
    %24 = arith.mulf %20, %23 : vector<16x32xf32>
    %c0_17 = arith.constant 0 : index
    %c0_18 = arith.constant 0 : index
    %25 = vector.load %arg3[%c0_17, %c0_18] : memref<32x4xf32, #tpu.memory_space<vmem>>, vector<32x4xf32>
    %cst_19 = arith.constant dense<0.000000e+00> : vector<16x4xf32>
    %26 = tpu.matmul %24, %25, %cst_19 {dimension_numbers = #tpu.dot_dimension_numbers<[1], [0], [0], [1], [0, 0, 1, 1], [], []>} : vector<16x32xf32>, vector<32x4xf32>, vector<16x4xf32> -> vector<16x4xf32>
    %c0_20 = arith.constant 0 : index
    %c0_21 = arith.constant 0 : index
    %27 = vector.load %arg8[%c0_20, %c0_21] : memref<16x4xf32, #tpu.memory_space<vmem>>, vector<16x4xf32>
    tpu.vector_store %arg8[%c0_20, %c0_21], %26 {strides = array<i32>} : memref<16x4xf32, #tpu.memory_space<vmem>>, vector<16x4xf32>,
    return
  }
}

</mosaic_0001>

<llo_original>
// kernel: tpu_custom_call.1
$region0: #{tpu_custom_call.1}
  #allocation0 [shape = 'u32[]', space=smem, size = 0x4, offset = 0x4, fixed_abs, tag = 'smem constant byte address 0x4 - core index']
  #allocation1 [shape = 'u32[144,128]{1,0:T(1,128)}', space=vmem, size = 0x12000, scoped, tag = 'internal scratch']
  %s0 = inlined_call_operand.vmem [shape: f32[16,4], index: 0, kind: input, shape index: {}]
  %s1 = inlined_call_operand.hbm [shape: f32[4,32], index: 1, kind: input, shape index: {}]
  %s2 = inlined_call_operand.vmem [shape: f32[1,32], index: 2, kind: input, shape index: {}]
  %s3 = inlined_call_operand.vmem [shape: f32[32,4], index: 3, kind: input, shape index: {}]
  %s4 = inlined_call_operand.vmem [shape: f32[32,32], index: 4, kind: input, shape index: {}]
  %s5 = inlined_call_operand.vmem [shape: f32[1,32], index: 5, kind: input, shape index: {}]
  %s6 = inlined_call_operand.vmem [shape: f32[32,32], index: 6, kind: input, shape index: {}]
  %s7 = inlined_call_operand.vmem [shape: f32[1,32], index: 7, kind: input, shape index: {}]
  %s8 = inlined_call_operand.vmem [shape: f32[16,4], index: 8, kind: output, shape index: {}]
  %s9 = sld [smem:[#allocation0]]
  $region46: #{tpu_custom_call.1} parent=0
    _
  %s11 = ssub.s32 1, %s9
  %s12 = scalar_select 0, %s11, %s9
  $region1: #{tpu_custom_call.1} parent=0
    #allocation2 [shape = 'u8[2048]{0}', space=vmem, size = 0x800, scoped, tag = 'input window, operand 1, single buffered']
    #allocation3 [shape = 's32[1]{0}', space=sflag, size = 0x4, scoped, tag = 'scoped memory for tpu_custom_call.1']
    %13 = vsyncpa [#allocation3], 0
    // Predicated region
    $region2: #{tpu_custom_call.1} parent=1 // pred_check
      _
    $region3: #{tpu_custom_call.1} parent=1 // pred_check_branch
      %15 = sbr.rel (0) target = $region5
    $region4: #{tpu_custom_call.1} parent=1 // pred_region
      _
    $region5: #{tpu_custom_call.1} parent=1 // pred_fallthru
      _
    // Predicated region
    $region6: #{tpu_custom_call.1} parent=1 // pred_check
      _
    $region7: #{tpu_custom_call.1} parent=1 // pred_check_branch
      %17 = sbr.rel (0) target = $region9
    $region8: #{tpu_custom_call.1} parent=1 // pred_region
      %s19 = ssub.s32 64, 64
      %20 = vsyncadd [#allocation3], %s19
      %s22 = sshll.u32 [#allocation2], 4
      %s23 = int_to_ptr.vmem [resolvable:$true] %s22
      %25 = dma.hbm_to_vmem [thread:$0]  %s1, 64, %s23, [#allocation3]
    $region9: #{tpu_custom_call.1} parent=1 // pred_fallthru
      _
    // Predicated region
    $region10: #{tpu_custom_call.1} parent=1 // pred_check
      _
    $region11: #{tpu_custom_call.1} parent=1 // pred_check_branch
      %27 = sbr.rel (0) target = $region13
    $region12: #{tpu_custom_call.1} parent=1 // pred_region
      _
    $region13: #{tpu_custom_call.1} parent=1 // pred_fallthru
      _
    // Predicated region
    $region14: #{tpu_custom_call.1} parent=1 // pred_check
      _
    $region15: #{tpu_custom_call.1} parent=1 // pred_check_branch
      %29 = sbr.rel (0) target = $region17
    $region16: #{tpu_custom_call.1} parent=1 // pred_region
      _
    $region17: #{tpu_custom_call.1} parent=1 // pred_fallthru
      _
    // Predicated region
    $region18: #{tpu_custom_call.1} parent=1 // pred_check
      _
    $region19: #{tpu_custom_call.1} parent=1 // pred_check_branch
      %31 = sbr.rel (0) target = $region21
    $region20: #{tpu_custom_call.1} parent=1 // pred_region
      _
    $region21: #{tpu_custom_call.1} parent=1 // pred_fallthru
      _
    // Predicated region
    $region22: #{tpu_custom_call.1} parent=1 // pred_check
      _
    $region23: #{tpu_custom_call.1} parent=1 // pred_check_branch
      %33 = sbr.rel (0) target = $region25
    $region24: #{tpu_custom_call.1} parent=1 // pred_region
      _
    $region25: #{tpu_custom_call.1} parent=1 // pred_fallthru
      _
    // Predicated region
    $region26: #{tpu_custom_call.1} parent=1 // pred_check
      _
    $region27: #{tpu_custom_call.1} parent=1 // pred_check_branch
      %35 = sbr.rel (0) target = $region29
    $region28: #{tpu_custom_call.1} parent=1 // pred_region
      _
    $region29: #{tpu_custom_call.1} parent=1 // pred_fallthru
      _
    // Predicated region
    $region30: #{tpu_custom_call.1} parent=1 // pred_check
      _
    $region31: #{tpu_custom_call.1} parent=1 // pred_check_branch
      %37 = sbr.rel (0) target = $region33
    $region32: #{tpu_custom_call.1} parent=1 // pred_region
      _
    $region33: #{tpu_custom_call.1} parent=1 // pred_fallthru
      _
    // Predicated region
    $region34: #{tpu_custom_call.1} parent=1 // pred_check
      _
    $region35: #{tpu_custom_call.1} parent=1 // pred_check_branch
      %39 = sbr.rel (0) target = $region37
    $region36: #{tpu_custom_call.1} parent=1 // pred_region
      %40 = dma.done [#allocation3], 64
    $region37: #{tpu_custom_call.1} parent=1 // pred_fallthru
      _
    %v41 = vld [vmem:[%s0] sm:$0xff]
    %v42 = vld [vmem:[%s0 + $0x8] sm:$0xff]
    %v43 = vld [vmem:[#allocation2] sm:$0xf]
    %v44 = vld [vmem:[%s2] sm:$0x1]
    %v46 = vlaneseq
    %v47 = vshrl.u32 %v46, 7
    %v48 = vsub.s32 0, %v47
    %v49 = vrot.slane %v44, %v48
    %vm51 = vcmask 31744
    %v53 = vsel %vm51, %v41, 0
    %v56 = vsel %vm51, %v42, 0
    %vm58 = vcmask 1043456
    %v60 = vsel %vm58, %v43, 0
    %62 = vmatprep.subr.mxu0 0.0
    %63 = vmatpush1.msra.mxu0 %v60
    %64 = vmatprep.subr.mxu0 0.0
    %65 = vmatpush1.msra.mxu0 0.0
    %66 = vmatprep.subr.mxu0 0.0
    %67 = vmatpush1.msra.mxu0 0.0
    %68 = vmatprep.subr.mxu0 0.0
    %69 = vmatpush1.msra.mxu0 0.0
    %70 = vmatprep.subr.mxu0 0.0
    %71 = vmatpush1.msra.mxu0 0.0
    %72 = vmatprep.subr.mxu0 0.0
    %73 = vmatpush1.msra.mxu0 0.0
    %74 = vmatprep.subr.mxu0 0.0
    %75 = vmatpush1.msra.mxu0 0.0
    %76 = vmatprep.subr.mxu0 0.0
    %77 = vmatpush1.msra.mxu0 0.0
    %78 = vmatprep.subr.mxu0 0.0
    %79 = vmatpush1.msra.mxu0 0.0
    %80 = vmatprep.subr.mxu0 0.0
    %81 = vmatpush1.msra.mxu0 0.0
    %82 = vmatprep.subr.mxu0 0.0
    %83 = vmatpush1.msra.mxu0 0.0
    %84 = vmatprep.subr.mxu0 0.0
    %85 = vmatpush1.msra.mxu0 0.0
    %86 = vmatprep.subr.mxu0 0.0
    %87 = vmatpush1.msra.mxu0 0.0
    %88 = vmatprep.subr.mxu0 0.0
    %89 = vmatpush1.msra.mxu0 0.0
    %90 = vmatprep.subr.mxu0 0.0
    %91 = vmatpush1.msra.mxu0 0.0
    %92 = vmatprep.subr.mxu0 0.0
    %93 = vmatpush1.msra.mxu0 0.0
    %94 = vmatprep.subr.mxu0 0.0
    %95 = vmatpush1.msra.mxu0 0.0
    %96 = vmatprep.subr.mxu0 0.0
    %97 = vmatpush1.msra.mxu0 0.0
    %98 = vmatprep.subr.mxu0 0.0
    %99 = vmatpush1.msra.mxu0 0.0
    %100 = vmatprep.subr.mxu0 0.0
    %101 = vmatpush1.msra.mxu0 0.0
    %102 = vmatprep.subr.mxu0 0.0
    %103 = vmatpush1.msra.mxu0 0.0
    %104 = vmatprep.subr.mxu0 0.0
    %105 = vmatpush1.msra.mxu0 0.0
    %106 = vmatprep.subr.mxu0 0.0
    %107 = vmatpush1.msra.mxu0 0.0
    %108 = vmatprep.subr.mxu0 0.0
    %109 = vmatpush1.msra.mxu0 0.0
    %110 = vmatprep.subr.mxu0 0.0
    %111 = vmatpush1.msra.mxu0 0.0
    %112 = vmatprep.subr.mxu0 0.0
    %113 = vmatpush1.msra.mxu0 0.0
    %114 = vmatprep.subr.mxu0 0.0
    %115 = vmatpush1.msra.mxu0 0.0
    %116 = vmatprep.subr.mxu0 0.0
    %117 = vmatpush1.msra.mxu0 0.0
    %118 = vmatprep.subr.mxu0 0.0
    %119 = vmatpush1.msra.mxu0 0.0
    %120 = vmatprep.subr.mxu0 0.0
    %121 = vmatpush1.msra.mxu0 0.0
    %122 = vmatprep.subr.mxu0 0.0
    %123 = vmatpush1.msra.mxu0 0.0
    %124 = vmatprep.subr.mxu0 0.0
    %125 = vmatpush1.msra.mxu0 0.0
    %126 = vmatprep.mubr.f32.mxu0 0.0
    %127 = vmatmul.mubr.f32.gmra.mrb[0].mxu0 %v53
    %v128 = vpop.f32.mrb[0].mxu0
    %v129 = vadd.f32 %v49, %v128
    %v130 = vpop.f32.mrb[0].mxu0
    %131 = vmatprep.mubr.f32.mxu0 0.0
    %132 = vmatmul.mubr.f32.gmra.mrb[0].mxu0 %v56
    %v133 = vpop.f32.mrb[0].mxu0
    %v134 = vadd.f32 %v49, %v133
    %v135 = vpop.f32.mrb[0].mxu0
    %136 = vdwg.mxu0
    %v137 = vtanh.pop %v129
    %v138 = vtanh.pop %v134
    %v139 = vld [vmem:[%s4] sm:$0xff]
    %v140 = vld [vmem:[%s4 + $0x8] sm:$0xff]
    %v141 = vld [vmem:[%s4 + $0x10] sm:$0xff]
    %v142 = vld [vmem:[%s4 + $0x18] sm:$0xff]
    %v143 = vld [vmem:[%s5] sm:$0x1]
    %v145 = vlaneseq
    %v146 = vshrl.u32 %v145, 7
    %v147 = vsub.s32 0, %v146
    %v148 = vrot.slane %v143, %v147
    %vm150 = vcmask 261120
    %v152 = vsel %vm150, %v137, 0
    %v155 = vsel %vm150, %v138, 0
    %157 = vmatprep.subr.mxu0 0.0
    %158 = vmatpush1.msra.mxu0 %v139
    %159 = vmatprep.subr.mxu0 0.0
    %160 = vmatpush1.msra.mxu0 %v140
    %161 = vmatprep.subr.mxu0 0.0
    %162 = vmatpush1.msra.mxu0 %v141
    %163 = vmatprep.subr.mxu0 0.0
    %164 = vmatpush1.msra.mxu0 %v142
    %165 = vmatprep.subr.mxu0 0.0
    %166 = vmatpush1.msra.mxu0 0.0
    %167 = vmatprep.subr.mxu0 0.0
    %168 = vmatpush1.msra.mxu0 0.0
    %169 = vmatprep.subr.mxu0 0.0
    %170 = vmatpush1.msra.mxu0 0.0
    %171 = vmatprep.subr.mxu0 0.0
    %172 = vmatpush1.msra.mxu0 0.0
    %173 = vmatprep.subr.mxu0 0.0
    %174 = vmatpush1.msra.mxu0 0.0
    %175 = vmatprep.subr.mxu0 0.0
    %176 = vmatpush1.msra.mxu0 0.0
    %177 = vmatprep.subr.mxu0 0.0
    %178 = vmatpush1.msra.mxu0 0.0
    %179 = vmatprep.subr.mxu0 0.0
    %180 = vmatpush1.msra.mxu0 0.0
    %181 = vmatprep.subr.mxu0 0.0
    %182 = vmatpush1.msra.mxu0 0.0
    %183 = vmatprep.subr.mxu0 0.0
    %184 = vmatpush1.msra.mxu0 0.0
    %185 = vmatprep.subr.mxu0 0.0
    %186 = vmatpush1.msra.mxu0 0.0
    %187 = vmatprep.subr.mxu0 0.0
    %188 = vmatpush1.msra.mxu0 0.0
    %189 = vmatprep.subr.mxu0 0.0
    %190 = vmatpush1.msra.mxu0 0.0
    %191 = vmatprep.subr.mxu0 0.0
    %192 = vmatpush1.msra.mxu0 0.0
    %193 = vmatprep.subr.mxu0 0.0
    %194 = vmatpush1.msra.mxu0 0.0
    %195 = vmatprep.subr.mxu0 0.0
    %196 = vmatpush1.msra.mxu0 0.0
    %197 = vmatprep.subr.mxu0 0.0
    %198 = vmatpush1.msra.mxu0 0.0
    %199 = vmatprep.subr.mxu0 0.0
    %200 = vmatpush1.msra.mxu0 0.0
    %201 = vmatprep.subr.mxu0 0.0
    %202 = vmatpush1.msra.mxu0 0.0
    %203 = vmatprep.subr.mxu0 0.0
    %204 = vmatpush1.msra.mxu0 0.0
    %205 = vmatprep.subr.mxu0 0.0
    %206 = vmatpush1.msra.mxu0 0.0
    %207 = vmatprep.subr.mxu0 0.0
    %208 = vmatpush1.msra.mxu0 0.0
    %209 = vmatprep.subr.mxu0 0.0
    %210 = vmatpush1.msra.mxu0 0.0
    %211 = vmatprep.subr.mxu0 0.0
    %212 = vmatpush1.msra.mxu0 0.0
    %213 = vmatprep.subr.mxu0 0.0
    %214 = vmatpush1.msra.mxu0 0.0
    %215 = vmatprep.subr.mxu0 0.0
    %216 = vmatpush1.msra.mxu0 0.0
    %217 = vmatprep.subr.mxu0 0.0
    %218 = vmatpush1.msra.mxu0 0.0
    %219 = vmatprep.subr.mxu0 0.0
    %220 = vmatpush1.msra.mxu0 0.0
    %221 = vmatprep.mubr.f32.mxu0 0.0
    %222 = vmatmul.mubr.f32.gmra.mrb[0].mxu0 %v152
    %v223 = vpop.f32.mrb[0].mxu0
    %v224 = vadd.f32 %v148, %v223
    %v225 = vpop.f32.mrb[0].mxu0
    %226 = vmatprep.mubr.f32.mxu0 0.0
    %227 = vmatmul.mubr.f32.gmra.mrb[0].mxu0 %v155
    %v228 = vpop.f32.mrb[0].mxu0
    %v229 = vadd.f32 %v148, %v228
    %v230 = vpop.f32.mrb[0].mxu0
    %231 = vdwg.mxu0
    %v232 = vtanh.pop %v224
    %v233 = vtanh.pop %v229
    %v234 = vld [vmem:[%s7] sm:$0x1]
    %v235 = vmul.f32 %v232, %v232
    %v236 = vmul.f32 %v233, %v233
    %v237 = vsub.f32 1.0, %v235
    %v238 = vsub.f32 1.0, %v236
    %v240 = vlaneseq
    %v241 = vshrl.u32 %v240, 7
    %v242 = vsub.s32 0, %v241
    %v243 = vrot.slane %v234, %v242
    %v245 = vmul.f32 %v243, %v237
    %v246 = vmul.f32 %v243, %v238
    %v247 = vld [vmem:[%s6] sm:$0xff]
    %v248 = vld [vmem:[%s6 + $0x8] sm:$0xff]
    %v249 = vld [vmem:[%s6 + $0x10] sm:$0xff]
    %v250 = vld [vmem:[%s6 + $0x18] sm:$0xff]
    %v252 = vsel %vm150, %v245, 0
    %v255 = vsel %vm150, %v246, 0
    %257 = vmatprep.subr.mxu0 0.0
    %258 = vmatpush1.msra.mxu0 %v247
    %259 = vmatprep.subr.mxu0 0.0
    %260 = vmatpush1.msra.mxu0 %v248
    %261 = vmatprep.subr.mxu0 0.0
    %262 = vmatpush1.msra.mxu0 %v249
    %263 = vmatprep.subr.mxu0 0.0
    %264 = vmatpush1.msra.mxu0 %v250
    %265 = vmatprep.subr.mxu0 0.0
    %266 = vmatpush1.msra.mxu0 0.0
    %267 = vmatprep.subr.mxu0 0.0
    %268 = vmatpush1.msra.mxu0 0.0
    %269 = vmatprep.subr.mxu0 0.0
    %270 = vmatpush1.msra.mxu0 0.0
    %271 = vmatprep.subr.mxu0 0.0
    %272 = vmatpush1.msra.mxu0 0.0
    %273 = vmatprep.subr.mxu0 0.0
    %274 = vmatpush1.msra.mxu0 0.0
    %275 = vmatprep.subr.mxu0 0.0
    %276 = vmatpush1.msra.mxu0 0.0
    %277 = vmatprep.subr.mxu0 0.0
    %278 = vmatpush1.msra.mxu0 0.0
    %279 = vmatprep.subr.mxu0 0.0
    %280 = vmatpush1.msra.mxu0 0.0
    %281 = vmatprep.subr.mxu0 0.0
    %282 = vmatpush1.msra.mxu0 0.0
    %283 = vmatprep.subr.mxu0 0.0
    %284 = vmatpush1.msra.mxu0 0.0
    %285 = vmatprep.subr.mxu0 0.0
    %286 = vmatpush1.msra.mxu0 0.0
    %287 = vmatprep.subr.mxu0 0.0
    %288 = vmatpush1.msra.mxu0 0.0
    %289 = vmatprep.subr.mxu0 0.0
    %290 = vmatpush1.msra.mxu0 0.0
    %291 = vmatprep.subr.mxu0 0.0
    %292 = vmatpush1.msra.mxu0 0.0
    %293 = vmatprep.subr.mxu0 0.0
    %294 = vmatpush1.msra.mxu0 0.0
    %295 = vmatprep.subr.mxu0 0.0
    %296 = vmatpush1.msra.mxu0 0.0
    %297 = vmatprep.subr.mxu0 0.0
    %298 = vmatpush1.msra.mxu0 0.0
    %299 = vmatprep.subr.mxu0 0.0
    %300 = vmatpush1.msra.mxu0 0.0
    %301 = vmatprep.subr.mxu0 0.0
    %302 = vmatpush1.msra.mxu0 0.0
    %303 = vmatprep.subr.mxu0 0.0
    %304 = vmatpush1.msra.mxu0 0.0
    %305 = vmatprep.subr.mxu0 0.0
    %306 = vmatpush1.msra.mxu0 0.0
    %307 = vmatprep.subr.mxu0 0.0
    %308 = vmatpush1.msra.mxu0 0.0
    %309 = vmatprep.subr.mxu0 0.0
    %310 = vmatpush1.msra.mxu0 0.0
    %311 = vmatprep.subr.mxu0 0.0
    %312 = vmatpush1.msra.mxu0 0.0
    %313 = vmatprep.subr.mxu0 0.0
    %314 = vmatpush1.msra.mxu0 0.0
    %315 = vmatprep.subr.mxu0 0.0
    %316 = vmatpush1.msra.mxu0 0.0
    %317 = vmatprep.subr.mxu0 0.0
    %318 = vmatpush1.msra.mxu0 0.0
    %319 = vmatprep.subr.mxu0 0.0
    %320 = vmatpush1.msra.mxu0 0.0
    %321 = vmatprep.mubr.f32.mxu0 0.0
    %322 = vmatmul.mubr.f32.gmra.mrb[0].mxu0 %v252
    %v323 = vpop.f32.mrb[0].mxu0
    %v324 = vadd.f32 0.0, %v323
    %v325 = vpop.f32.mrb[0].mxu0
    %326 = vmatprep.mubr.f32.mxu0 0.0
    %327 = vmatmul.mubr.f32.gmra.mrb[0].mxu0 %v255
    %v328 = vpop.f32.mrb[0].mxu0
    %v329 = vadd.f32 0.0, %v328
    %v330 = vpop.f32.mrb[0].mxu0
    %331 = vdwg.mxu0
    %v332 = vmul.f32 %v137, %v137
    %v333 = vmul.f32 %v138, %v138
    %v334 = vsub.f32 1.0, %v332
    %v335 = vsub.f32 1.0, %v333
    %v336 = vmul.f32 %v324, %v334
    %v337 = vmul.f32 %v329, %v335
    %v338 = vld [vmem:[%s3] sm:$0xff]
    %v339 = vld [vmem:[%s3 + $0x8] sm:$0xff]
    %v340 = vld [vmem:[%s3 + $0x10] sm:$0xff]
    %v341 = vld [vmem:[%s3 + $0x18] sm:$0xff]
    %v343 = vsel %vm150, %v336, 0
    %v346 = vsel %vm150, %v337, 0
    %348 = vmatprep.subr.mxu0 0.0
    %349 = vmatpush1.msra.mxu0 %v338
    %350 = vmatprep.subr.mxu0 0.0
    %351 = vmatpush1.msra.mxu0 %v339
    %352 = vmatprep.subr.mxu0 0.0
    %353 = vmatpush1.msra.mxu0 %v340
    %354 = vmatprep.subr.mxu0 0.0
    %355 = vmatpush1.msra.mxu0 %v341
    %356 = vmatprep.subr.mxu0 0.0
    %357 = vmatpush1.msra.mxu0 0.0
    %358 = vmatprep.subr.mxu0 0.0
    %359 = vmatpush1.msra.mxu0 0.0
    %360 = vmatprep.subr.mxu0 0.0
    %361 = vmatpush1.msra.mxu0 0.0
    %362 = vmatprep.subr.mxu0 0.0
    %363 = vmatpush1.msra.mxu0 0.0
    %364 = vmatprep.subr.mxu0 0.0
    %365 = vmatpush1.msra.mxu0 0.0
    %366 = vmatprep.subr.mxu0 0.0
    %367 = vmatpush1.msra.mxu0 0.0
    %368 = vmatprep.subr.mxu0 0.0
    %369 = vmatpush1.msra.mxu0 0.0
    %370 = vmatprep.subr.mxu0 0.0
    %371 = vmatpush1.msra.mxu0 0.0
    %372 = vmatprep.subr.mxu0 0.0
    %373 = vmatpush1.msra.mxu0 0.0
    %374 = vmatprep.subr.mxu0 0.0
    %375 = vmatpush1.msra.mxu0 0.0
    %376 = vmatprep.subr.mxu0 0.0
    %377 = vmatpush1.msra.mxu0 0.0
    %378 = vmatprep.subr.mxu0 0.0
    %379 = vmatpush1.msra.mxu0 0.0
    %380 = vmatprep.subr.mxu0 0.0
    %381 = vmatpush1.msra.mxu0 0.0
    %382 = vmatprep.subr.mxu0 0.0
    %383 = vmatpush1.msra.mxu0 0.0
    %384 = vmatprep.subr.mxu0 0.0
    %385 = vmatpush1.msra.mxu0 0.0
    %386 = vmatprep.subr.mxu0 0.0
    %387 = vmatpush1.msra.mxu0 0.0
    %388 = vmatprep.subr.mxu0 0.0
    %389 = vmatpush1.msra.mxu0 0.0
    %390 = vmatprep.subr.mxu0 0.0
    %391 = vmatpush1.msra.mxu0 0.0
    %392 = vmatprep.subr.mxu0 0.0
    %393 = vmatpush1.msra.mxu0 0.0
    %394 = vmatprep.subr.mxu0 0.0
    %395 = vmatpush1.msra.mxu0 0.0
    %396 = vmatprep.subr.mxu0 0.0
    %397 = vmatpush1.msra.mxu0 0.0
    %398 = vmatprep.subr.mxu0 0.0
    %399 = vmatpush1.msra.mxu0 0.0
    %400 = vmatprep.subr.mxu0 0.0
    %401 = vmatpush1.msra.mxu0 0.0
    %402 = vmatprep.subr.mxu0 0.0
    %403 = vmatpush1.msra.mxu0 0.0
    %404 = vmatprep.subr.mxu0 0.0
    %405 = vmatpush1.msra.mxu0 0.0
    %406 = vmatprep.subr.mxu0 0.0
    %407 = vmatpush1.msra.mxu0 0.0
    %408 = vmatprep.subr.mxu0 0.0
    %409 = vmatpush1.msra.mxu0 0.0
    %410 = vmatprep.subr.mxu0 0.0
    %411 = vmatpush1.msra.mxu0 0.0
    %412 = vmatprep.mubr.f32.mxu0 0.0
    %413 = vmatmul.mubr.f32.gmra.mrb[0].mxu0 %v343
    %v414 = vpop.f32.mrb[0].mxu0
    %v415 = vadd.f32 0.0, %v414
    %v416 = vpop.f32.mrb[0].mxu0
    %417 = vmatprep.mubr.f32.mxu0 0.0
    %418 = vmatmul.mubr.f32.gmra.mrb[0].mxu0 %v346
    %v419 = vpop.f32.mrb[0].mxu0
    %v420 = vadd.f32 0.0, %v419
    %v421 = vpop.f32.mrb[0].mxu0
    %422 = vdwg.mxu0
    %423 = vst.msk [vmem:[%s8] sm:$0xff] %vm51, %v415
    %424 = vst.msk [vmem:[%s8 + $0x8] sm:$0xff] %vm51, %v420
    // Predicated region
    $region38: #{tpu_custom_call.1} parent=1 // pred_check
      _
    $region39: #{tpu_custom_call.1} parent=1 // pred_check_branch
      %426 = sbr.rel (0) target = $region41
    $region40: #{tpu_custom_call.1} parent=1 // pred_region
      _
    $region41: #{tpu_custom_call.1} parent=1 // pred_fallthru
      _
    // Predicated region
    $region42: #{tpu_custom_call.1} parent=1 // pred_check
      _
    $region43: #{tpu_custom_call.1} parent=1 // pred_check_branch
      %428 = sbr.rel (0) target = $region45
    $region44: #{tpu_custom_call.1} parent=1 // pred_region
      _
    $region45: #{tpu_custom_call.1} parent=1 // pred_fallthru
      _
    %429 = vsyncpa [#allocation3], 1

</llo_original>
